<compile_context>
chip_gen: v6e
topology: v6e:2x2x1
jax: 0.10.0
libtpu: 0.0.40
codegen_flags: <defaults>
</compile_context>

<pallas_src>
import functools

import jax
import jax.numpy as jnp
from jax.experimental import pallas as pl
from jax.experimental.pallas import tpu as pltpu


def _round_up(n, m):
    return ((n + m - 1) // m) * m


def mlp_kernel(x_ref, w1_ref, b1_ref, w2_ref, b2_ref, w3_ref, b3_ref, o_ref):
    cd = w1_ref.dtype  # compute dtype for matmul inputs (f32 or bf16)
    # fc1 + relu   (K is tiny; MXU dot is fine — accumulation always in f32)
    h = jnp.dot(x_ref[...].astype(cd), w1_ref[...],
                preferred_element_type=jnp.float32)
    h = jnp.maximum(h + b1_ref[...], 0.0)          # f32 bias add / ReLU (VPU)
    # fc2 + relu
    h = jnp.dot(h.astype(cd), w2_ref[...], preferred_element_type=jnp.float32)
    h = jnp.maximum(h + b2_ref[...], 0.0)
    # output head
    q = jnp.dot(h.astype(cd), w3_ref[...], preferred_element_type=jnp.float32)
    o_ref[...] = (q + b3_ref[...]).astype(o_ref.dtype)


def prepare_params(params, *, compute_dtype=jnp.float32,
                   states_align=8, hidden_align=128, actions_align=128):
    """One-time: transpose PyTorch (out,in) weights to (in,out), zero-pad to
    lane/sublane-aligned sizes, cast matmul weights to compute_dtype.
    Biases stay f32 (elementwise path is f32 on all chips)."""
    n_hidden, n_states = params["fc1_w"].shape
    n_actions = params["out_w"].shape[0]
    S = _round_up(n_states, states_align)
    H = _round_up(n_hidden, hidden_align)
    A = _round_up(n_actions, actions_align)

    def pad_w(w, in_dim, out_dim, in_pad, out_pad):
        wt = w.T.astype(jnp.float32)                       # (in, out)
        wp = jnp.zeros((in_pad, out_pad), jnp.float32)
        wp = wp.at[:in_dim, :out_dim].set(wt)
        return wp.astype(compute_dtype)

    def pad_b(b, out_dim, out_pad):
        bp = jnp.zeros((1, out_pad), jnp.float32)
        return bp.at[0, :out_dim].set(b.astype(jnp.float32))

    w1 = pad_w(params["fc1_w"], n_states, n_hidden, S, H)
    b1 = pad_b(params["fc1_b"], n_hidden, H)
    w2 = pad_w(params["fc2_w"], n_hidden, n_hidden, H, H)
    b2 = pad_b(params["fc2_b"], n_hidden, H)
    w3 = pad_w(params["out_w"], n_hidden, n_actions, H, A)
    b3 = pad_b(params["out_b"], n_actions, A)
    return (w1, b1, w2, b2, w3, b3)


@functools.partial(jax.jit, static_argnames=("n_actions", "tile_b"))
def dqn_forward(x, prepared, *, n_actions, tile_b=256):
    """x: (B, n_states) f32. prepared: output of prepare_params. -> (B, n_actions) f32."""
    w1, b1, w2, b2, w3, b3 = prepared
    B, n_states = x.shape
    S, H = w1.shape
    A = w3.shape[1]
    cd = w1.dtype

    # Batch tiling: tile rows (multiple of 8 sublanes), pad batch to a whole tile.
    tb = min(tile_b, _round_up(B, 8))
    B_pad = _round_up(B, tb)

    if (B_pad, S) == x.shape and x.dtype == cd:
        xp = x
    else:
        xp = jnp.zeros((B_pad, S), cd).at[:B, :n_states].set(x.astype(cd))

    out = pl.pallas_call(
        mlp_kernel,
        out_shape=jax.ShapeDtypeStruct((B_pad, A), jnp.float32),
        grid=(B_pad // tb,),
        in_specs=[
            pl.BlockSpec((tb, S), lambda i: (i, 0)),   # x: tiled over batch
            pl.BlockSpec((S, H), lambda i: (0, 0)),    # weights/biases: VMEM-resident
            pl.BlockSpec((1, H), lambda i: (0, 0)),
            pl.BlockSpec((H, H), lambda i: (0, 0)),
            pl.BlockSpec((1, H), lambda i: (0, 0)),
            pl.BlockSpec((H, A), lambda i: (0, 0)),
            pl.BlockSpec((1, A), lambda i: (0, 0)),
        ],
        out_specs=pl.BlockSpec((tb, A), lambda i: (i, 0)),
        compiler_params=pltpu.CompilerParams(
            dimension_semantics=("parallel",)),
    )(xp, w1, b1, w2, b2, w3, b3)

    return out[:B, :n_actions]


def init_params(key, n_states, n_hidden, n_actions):
    """Deterministic init mimicking nn.Linear default (uniform +/- 1/sqrt(fan_in))."""
    ks = jax.random.split(key, 6)

    def lin(kw, kb, fan_in, fan_out):
        bound = 1.0 / jnp.sqrt(fan_in)
        w = jax.random.uniform(kw, (fan_out, fan_in), jnp.float32, -bound, bound)
        b = jax.random.uniform(kb, (fan_out,), jnp.float32, -bound, bound)
        return w, b

    fc1_w, fc1_b = lin(ks[0], ks[1], n_states, n_hidden)
    fc2_w, fc2_b = lin(ks[2], ks[3], n_hidden, n_hidden)
    out_w, out_b = lin(ks[4], ks[5], n_hidden, n_actions)
    return dict(fc1_w=fc1_w, fc1_b=fc1_b,
                fc2_w=fc2_w, fc2_b=fc2_b,
                out_w=out_w, out_b=out_b)


def reference_forward(x, params):
    h = jnp.maximum(x @ params["fc1_w"].T + params["fc1_b"], 0.0)
    h = jnp.maximum(h @ params["fc2_w"].T + params["fc2_b"], 0.0)
    return h @ params["out_w"].T + params["out_b"]


if __name__ == "__main__":
    n_states, n_hidden, n_actions = 4, 50, 2   # CartPole-v0: obs dim 4, 2 actions
    batch = 8

    key = jax.random.PRNGKey(0)
    kx, kp = jax.random.split(key)
    x = jax.random.normal(kx, (batch, n_states), jnp.float32)
    params = init_params(kp, n_states, n_hidden, n_actions)
    q_ref = reference_forward(x, params)

    # f32 compute path (exact vs reference).
    prep_f32 = prepare_params(params, compute_dtype=jnp.float32)
    q = jax.block_until_ready(dqn_forward(x, prep_f32, n_actions=n_actions))
    assert q.shape == (batch, n_actions)
    assert jnp.allclose(q, q_ref, atol=1e-5, rtol=1e-5)

    # bf16 matmul path (f32 accumulation / bias / ReLU) — v6e/v7x throughput mode.
    prep_bf16 = prepare_params(params, compute_dtype=jnp.bfloat16)
    q_bf16 = jax.block_until_ready(dqn_forward(x, prep_bf16, n_actions=n_actions))
    assert q_bf16.shape == (batch, n_actions)
    assert jnp.allclose(q_bf16, q_ref, atol=5e-2, rtol=5e-2)

    print("KERNEL_OK")
</pallas_src>

<mosaic_0001>
module attributes {stable_mosaic.version = 11 : i64} {
  func.func @mlp_kernel(%arg0: i32, %arg1: memref<8x8xf32, #tpu.memory_space<vmem>>, %arg2: memref<8x128xf32, #tpu.memory_space<vmem>>, %arg3: memref<1x128xf32, #tpu.memory_space<vmem>>, %arg4: memref<128x128xf32, #tpu.memory_space<vmem>>, %arg5: memref<1x128xf32, #tpu.memory_space<vmem>>, %arg6: memref<128x128xf32, #tpu.memory_space<vmem>>, %arg7: memref<1x128xf32, #tpu.memory_space<vmem>>, %arg8: memref<8x128xf32, #tpu.memory_space<vmem>>) attributes {dimension_semantics = [#tpu.dimension_semantics<parallel>], iteration_bounds = array<i64: 1>, scalar_prefetch = 0 : i64, scratch_operands = 0 : i64, tpu.core_type = #tpu.core_type<tc>, window_params = [{transform_indices = @transform_0, window_bounds = array<i64: 8, 8>}, {pipeline_mode = #tpu.pipeline_mode<synchronous>, transform_indices = @transform_1, window_bounds = array<i64: 8, 128>}, {pipeline_mode = #tpu.pipeline_mode<synchronous>, transform_indices = @transform_2, window_bounds = array<i64: 1, 128>}, {pipeline_mode = #tpu.pipeline_mode<synchronous>, transform_indices = @transform_3, window_bounds = array<i64: 128, 128>}, {pipeline_mode = #tpu.pipeline_mode<synchronous>, transform_indices = @transform_4, window_bounds = array<i64: 1, 128>}, {pipeline_mode = #tpu.pipeline_mode<synchronous>, transform_indices = @transform_5, window_bounds = array<i64: 128, 128>}, {pipeline_mode = #tpu.pipeline_mode<synchronous>, transform_indices = @transform_6, window_bounds = array<i64: 1, 128>}, {transform_indices = @transform_7, window_bounds = array<i64: 8, 128>}]} {
    %c0 = arith.constant 0 : index
    %c0_0 = arith.constant 0 : index
    %0 = vector.load %arg1[%c0, %c0_0] : memref<8x8xf32, #tpu.memory_space<vmem>>, vector<8x8xf32>
    %c0_1 = arith.constant 0 : index
    %c0_2 = arith.constant 0 : index
    %1 = vector.load %arg2[%c0_1, %c0_2] : memref<8x128xf32, #tpu.memory_space<vmem>>, vector<8x128xf32>
    %cst = arith.constant dense<0.000000e+00> : vector<8x128xf32>
    %2 = tpu.matmul %0, %1, %cst {dimension_numbers = #tpu.dot_dimension_numbers<[1], [0], [0], [1], [0, 0, 1, 1], [], []>} : vector<8x8xf32>, vector<8x128xf32>, vector<8x128xf32> -> vector<8x128xf32>
    %c0_3 = arith.constant 0 : index
    %c0_4 = arith.constant 0 : index
    %3 = vector.load %arg3[%c0_3, %c0_4] : memref<1x128xf32, #tpu.memory_space<vmem>>, vector<1x128xf32>
    %4 = vector.broadcast %3 : vector<1x128xf32> to vector<8x128xf32>
    %5 = arith.addf %2, %4 : vector<8x128xf32>
    %cst_5 = arith.constant 0.000000e+00 : f32
    %6 = vector.broadcast %cst_5 : f32 to vector<8x128xf32>
    %7 = arith.maximumf %5, %6 : vector<8x128xf32>
    %c0_6 = arith.constant 0 : index
    %c0_7 = arith.constant 0 : index
    %8 = vector.load %arg4[%c0_6, %c0_7] : memref<128x128xf32, #tpu.memory_space<vmem>>, vector<128x128xf32>
    %cst_8 = arith.constant dense<0.000000e+00> : vector<8x128xf32>
    %9 = tpu.matmul %7, %8, %cst_8 {dimension_numbers = #tpu.dot_dimension_numbers<[1], [0], [0], [1], [0, 0, 1, 1], [], []>} : vector<8x128xf32>, vector<128x128xf32>, vector<8x128xf32> -> vector<8x128xf32>
    %c0_9 = arith.constant 0 : index
    %c0_10 = arith.constant 0 : index
    %10 = vector.load %arg5[%c0_9, %c0_10] : memref<1x128xf32, #tpu.memory_space<vmem>>, vector<1x128xf32>
    %11 = vector.broadcast %10 : vector<1x128xf32> to vector<8x128xf32>
    %12 = arith.addf %9, %11 : vector<8x128xf32>
    %cst_11 = arith.constant 0.000000e+00 : f32
    %13 = vector.broadcast %cst_11 : f32 to vector<8x128xf32>
    %14 = arith.maximumf %12, %13 : vector<8x128xf32>
    %c0_12 = arith.constant 0 : index
    %c0_13 = arith.constant 0 : index
    %15 = vector.load %arg6[%c0_12, %c0_13] : memref<128x128xf32, #tpu.memory_space<vmem>>, vector<128x128xf32>
    %cst_14 = arith.constant dense<0.000000e+00> : vector<8x128xf32>
    %16 = tpu.matmul %14, %15, %cst_14 {dimension_numbers = #tpu.dot_dimension_numbers<[1], [0], [0], [1], [0, 0, 1, 1], [], []>} : vector<8x128xf32>, vector<128x128xf32>, vector<8x128xf32> -> vector<8x128xf32>
    %c0_15 = arith.constant 0 : index
    %c0_16 = arith.constant 0 : index
    %17 = vector.load %arg7[%c0_15, %c0_16] : memref<1x128xf32, #tpu.memory_space<vmem>>, vector<1x128xf32>
    %18 = vector.broadcast %17 : vector<1x128xf32> to vector<8x128xf32>
    %19 = arith.addf %16, %18 : vector<8x128xf32>
    %c0_17 = arith.constant 0 : index
    %c0_18 = arith.constant 0 : index
    %20 = vector.load %arg8[%c0_17, %c0_18] : memref<8x128xf32, #tpu.memory_space<vmem>>, vector<8x128xf32>
    tpu.vector_store %arg8[%c0_17, %c0_18], %19 {strides = array<i32>} : memref<8x128xf32, #tpu.memory_space<vmem>>, vector<8x128xf32>,
    return
  }
  func.func @transform_0(%arg0: i32) -> (i32, i32) {
    %c0_i32 = arith.constant 0 : i32
    %c0_i32_0 = arith.constant 0 : i32
    return %arg0, %c0_i32 : i32, i32
  }
  func.func @transform_1(%arg0: i32) -> (i32, i32) {
    %c0_i32 = arith.constant 0 : i32
    %c0_i32_0 = arith.constant 0 : i32
    %c0_i32_1 = arith.constant 0 : i32
    return %c0_i32, %c0_i32_0 : i32, i32
  }
  func.func @transform_2(%arg0: i32) -> (i32, i32) {
    %c0_i32 = arith.constant 0 : i32
    %c0_i32_0 = arith.constant 0 : i32
    %c0_i32_1 = arith.constant 0 : i32
    return %c0_i32, %c0_i32_0 : i32, i32
  }
  func.func @transform_3(%arg0: i32) -> (i32, i32) {
    %c0_i32 = arith.constant 0 : i32
    %c0_i32_0 = arith.constant 0 : i32
    %c0_i32_1 = arith.constant 0 : i32
    return %c0_i32, %c0_i32_0 : i32, i32
  }
  func.func @transform_4(%arg0: i32) -> (i32, i32) {
    %c0_i32 = arith.constant 0 : i32
    %c0_i32_0 = arith.constant 0 : i32
    %c0_i32_1 = arith.constant 0 : i32
    return %c0_i32, %c0_i32_0 : i32, i32
  }
  func.func @transform_5(%arg0: i32) -> (i32, i32) {
    %c0_i32 = arith.constant 0 : i32
    %c0_i32_0 = arith.constant 0 : i32
    %c0_i32_1 = arith.constant 0 : i32
    return %c0_i32, %c0_i32_0 : i32, i32
  }
  func.func @transform_6(%arg0: i32) -> (i32, i32) {
    %c0_i32 = arith.constant 0 : i32
    %c0_i32_0 = arith.constant 0 : i32
    %c0_i32_1 = arith.constant 0 : i32
    return %c0_i32, %c0_i32_0 : i32, i32
  }
  func.func @transform_7(%arg0: i32) -> (i32, i32) {
    %c0_i32 = arith.constant 0 : i32
    %c0_i32_0 = arith.constant 0 : i32
    return %arg0, %c0_i32 : i32, i32
  }
}

</mosaic_0001>

<llo_original>
// kernel: dqn_forward.1
$region0: #{dqn_forward.1}
  #allocation0 [shape = 'u32[]', space=smem, size = 0x4, offset = 0x4, fixed_abs, tag = 'smem constant byte address 0x4 - core index']
  #allocation1 [shape = 'u32[144,128]{1,0:T(1,128)}', space=vmem, size = 0x12000, scoped, tag = 'internal scratch']
  %s0 = inlined_call_operand.vmem [shape: f32[8,8], index: 0, kind: input, shape index: {}]
  %s1 = inlined_call_operand.vmem [shape: f32[8,128], index: 1, kind: input, shape index: {}]
  %s2 = inlined_call_operand.vmem [shape: f32[1,128], index: 2, kind: input, shape index: {}]
  %s3 = inlined_call_operand.hbm [shape: f32[128,128], index: 3, kind: input, shape index: {}]
  %s4 = inlined_call_operand.vmem [shape: f32[1,128], index: 4, kind: input, shape index: {}]
  %s5 = inlined_call_operand.hbm [shape: f32[128,128], index: 5, kind: input, shape index: {}]
  %s6 = inlined_call_operand.vmem [shape: f32[1,128], index: 6, kind: input, shape index: {}]
  %s7 = inlined_call_operand.vmem [shape: f32[8,128], index: 7, kind: output, shape index: {}]
  %s8 = sld [smem:[#allocation0]]
  $region46: #{dqn_forward.1} parent=0
    _
  %s10 = ssub.s32 1, %s8
  %s11 = scalar_select 0, %s10, %s8
  $region1: #{dqn_forward.1} parent=0
    #allocation2 [shape = 'u8[65536]{0}', space=vmem, size = 0x10000, scoped, tag = 'input window, operand 3, single buffered']
    #allocation3 [shape = 's32[1]{0}', space=sflag, size = 0x4, scoped, tag = 'scoped memory for dqn_forward.1']
    #allocation4 [shape = 'u8[65536]{0}', space=vmem, size = 0x10000, scoped, tag = 'input window, operand 5, single buffered']
    #allocation5 [shape = 's32[1]{0}', space=sflag, size = 0x4, scoped, tag = 'scoped memory for dqn_forward.1']
    %12 = vsyncpa [#allocation3], 0
    %13 = vsyncpa [#allocation5], 0
    // Predicated region
    $region2: #{dqn_forward.1} parent=1 // pred_check
      _
    $region3: #{dqn_forward.1} parent=1 // pred_check_branch
      %15 = sbr.rel (0) target = $region5
    $region4: #{dqn_forward.1} parent=1 // pred_region
      _
    $region5: #{dqn_forward.1} parent=1 // pred_fallthru
      _
    // Predicated region
    $region6: #{dqn_forward.1} parent=1 // pred_check
      _
    $region7: #{dqn_forward.1} parent=1 // pred_check_branch
      %17 = sbr.rel (0) target = $region9
    $region8: #{dqn_forward.1} parent=1 // pred_region
      _
    $region9: #{dqn_forward.1} parent=1 // pred_fallthru
      _
    // Predicated region
    $region10: #{dqn_forward.1} parent=1 // pred_check
      _
    $region11: #{dqn_forward.1} parent=1 // pred_check_branch
      %19 = sbr.rel (0) target = $region13
    $region12: #{dqn_forward.1} parent=1 // pred_region
      _
    $region13: #{dqn_forward.1} parent=1 // pred_fallthru
      _
    // Predicated region
    $region14: #{dqn_forward.1} parent=1 // pred_check
      _
    $region15: #{dqn_forward.1} parent=1 // pred_check_branch
      %21 = sbr.rel (0) target = $region17
    $region16: #{dqn_forward.1} parent=1 // pred_region
      %s23 = ssub.s32 2048, 2048
      %24 = vsyncadd [#allocation3], %s23
      %s25 = sshll.u32 [#allocation2], 4
      %s26 = int_to_ptr.vmem [resolvable:$true] %s25
      %31 = dma.hbm_to_vmem [thread:$0]  %s3, 2048, %s26, [#allocation3], 128, 128, 8
    $region17: #{dqn_forward.1} parent=1 // pred_fallthru
      _
    // Predicated region
    $region18: #{dqn_forward.1} parent=1 // pred_check
      _
    $region19: #{dqn_forward.1} parent=1 // pred_check_branch
      %33 = sbr.rel (0) target = $region21
    $region20: #{dqn_forward.1} parent=1 // pred_region
      _
    $region21: #{dqn_forward.1} parent=1 // pred_fallthru
      _
    // Predicated region
    $region22: #{dqn_forward.1} parent=1 // pred_check
      _
    $region23: #{dqn_forward.1} parent=1 // pred_check_branch
      %35 = sbr.rel (0) target = $region25
    $region24: #{dqn_forward.1} parent=1 // pred_region
      %s37 = ssub.s32 2048, 2048
      %38 = vsyncadd [#allocation5], %s37
      %s39 = sshll.u32 [#allocation4], 4
      %s40 = int_to_ptr.vmem [resolvable:$true] %s39
      %45 = dma.hbm_to_vmem [thread:$0]  %s5, 2048, %s40, [#allocation5], 128, 128, 8
    $region25: #{dqn_forward.1} parent=1 // pred_fallthru
      _
    // Predicated region
    $region26: #{dqn_forward.1} parent=1 // pred_check
      _
    $region27: #{dqn_forward.1} parent=1 // pred_check_branch
      %47 = sbr.rel (0) target = $region29
    $region28: #{dqn_forward.1} parent=1 // pred_region
      _
    $region29: #{dqn_forward.1} parent=1 // pred_fallthru
      _
    // Predicated region
    $region30: #{dqn_forward.1} parent=1 // pred_check
      _
    $region31: #{dqn_forward.1} parent=1 // pred_check_branch
      %49 = sbr.rel (0) target = $region33
    $region32: #{dqn_forward.1} parent=1 // pred_region
      %50 = dma.done [#allocation3], 2048
    $region33: #{dqn_forward.1} parent=1 // pred_fallthru
      _
    // Predicated region
    $region34: #{dqn_forward.1} parent=1 // pred_check
      _
    $region35: #{dqn_forward.1} parent=1 // pred_check_branch
      %52 = sbr.rel (0) target = $region37
    $region36: #{dqn_forward.1} parent=1 // pred_region
      %53 = dma.done [#allocation5], 2048
    $region37: #{dqn_forward.1} parent=1 // pred_fallthru
      _
    %v54 = vld [vmem:[%s0] sm:$0xff]
    %v55 = vld [vmem:[%s1] sm:$0xff]
    %v56 = vld [vmem:[%s2] sm:$0x1]
    %v58 = vlaneseq
    %v59 = vshrl.u32 %v58, 7
    %v60 = vsub.s32 0, %v59
    %v61 = vrot.slane %v56, %v60
    %vm63 = vcmask 64512
    %v65 = vsel %vm63, %v54, 0
    %67 = vmatprep.subr.mxu0 0.0
    %68 = vmatpush1.msra.mxu0 0.0
    %69 = vmatprep.subr.mxu0 0.0
    %70 = vmatpush1.msra.mxu0 0.0
    %71 = vmatprep.subr.mxu0 0.0
    %72 = vmatpush1.msra.mxu0 0.0
    %73 = vmatprep.subr.mxu0 0.0
    %74 = vmatpush1.msra.mxu0 0.0
    %75 = vmatprep.subr.mxu0 0.0
    %76 = vmatpush1.msra.mxu0 0.0
    %77 = vmatprep.subr.mxu0 0.0
    %78 = vmatpush1.msra.mxu0 0.0
    %79 = vmatprep.subr.mxu0 0.0
    %80 = vmatpush1.msra.mxu0 0.0
    %81 = vmatprep.subr.mxu0 0.0
    %82 = vmatpush1.msra.mxu0 0.0
    %83 = vmatprep.subr.mxu0 0.0
    %84 = vmatpush1.msra.mxu0 0.0
    %85 = vmatprep.subr.mxu0 0.0
    %86 = vmatpush1.msra.mxu0 0.0
    %87 = vmatprep.subr.mxu0 0.0
    %88 = vmatpush1.msra.mxu0 0.0
    %89 = vmatprep.subr.mxu0 0.0
    %90 = vmatpush1.msra.mxu0 0.0
    %91 = vmatprep.subr.mxu0 0.0
    %92 = vmatpush1.msra.mxu0 0.0
    %93 = vmatprep.subr.mxu0 0.0
    %94 = vmatpush1.msra.mxu0 0.0
    %95 = vmatprep.subr.mxu0 0.0
    %96 = vmatpush1.msra.mxu0 0.0
    %97 = vmatprep.subr.mxu0 0.0
    %98 = vmatpush1.msra.mxu0 %v55
    %99 = vmatprep.subr.mxu0 0.0
    %100 = vmatpush2.msra.mxu0 0.0
    %101 = vmatprep.subr.mxu0 0.0
    %102 = vmatpush2.msra.mxu0 0.0
    %103 = vmatprep.subr.mxu0 0.0
    %104 = vmatpush2.msra.mxu0 0.0
    %105 = vmatprep.subr.mxu0 0.0
    %106 = vmatpush2.msra.mxu0 0.0
    %107 = vmatprep.subr.mxu0 0.0
    %108 = vmatpush2.msra.mxu0 0.0
    %109 = vmatprep.subr.mxu0 0.0
    %110 = vmatpush2.msra.mxu0 0.0
    %111 = vmatprep.subr.mxu0 0.0
    %112 = vmatpush2.msra.mxu0 0.0
    %113 = vmatprep.subr.mxu0 0.0
    %114 = vmatpush2.msra.mxu0 0.0
    %115 = vmatprep.subr.mxu0 0.0
    %116 = vmatpush2.msra.mxu0 0.0
    %117 = vmatprep.subr.mxu0 0.0
    %118 = vmatpush2.msra.mxu0 0.0
    %119 = vmatprep.subr.mxu0 0.0
    %120 = vmatpush2.msra.mxu0 0.0
    %121 = vmatprep.subr.mxu0 0.0
    %122 = vmatpush2.msra.mxu0 0.0
    %123 = vmatprep.subr.mxu0 0.0
    %124 = vmatpush2.msra.mxu0 0.0
    %125 = vmatprep.subr.mxu0 0.0
    %126 = vmatpush2.msra.mxu0 0.0
    %127 = vmatprep.subr.mxu0 0.0
    %128 = vmatpush2.msra.mxu0 0.0
    %129 = vmatprep.subr.mxu0 0.0
    %130 = vmatpush2.msra.mxu0 0.0
    %131 = vmatprep.mubr.f32.mxu0 0.0
    %132 = vmatmul.mubr.f32.gmra.mxu0 %v65
    %v133 = vpop.f32.mrf.mxu0
    %v134 = vadd.f32 %v61, %v133
    %v135 = vpop.f32.mrf.mxu0
    %136 = vdwg.mxu0
    %v137 = vmax.f32 %v134, 0.0
    %v138 = vld [vmem:[#allocation2] sm:$0xff]
    %v139 = vld [vmem:[#allocation2 + $0x8] sm:$0xff]
    %v140 = vld [vmem:[#allocation2 + $0x10] sm:$0xff]
    %v141 = vld [vmem:[#allocation2 + $0x18] sm:$0xff]
    %v142 = vld [vmem:[#allocation2 + $0x20] sm:$0xff]
    %v143 = vld [vmem:[#allocation2 + $0x28] sm:$0xff]
    %v144 = vld [vmem:[#allocation2 + $0x30] sm:$0xff]
    %v145 = vld [vmem:[#allocation2 + $0x38] sm:$0xff]
    %v146 = vld [vmem:[#allocation2 + $0x40] sm:$0xff]
    %v147 = vld [vmem:[#allocation2 + $0x48] sm:$0xff]
    %v148 = vld [vmem:[#allocation2 + $0x50] sm:$0xff]
    %v149 = vld [vmem:[#allocation2 + $0x58] sm:$0xff]
    %v150 = vld [vmem:[#allocation2 + $0x60] sm:$0xff]
    %v151 = vld [vmem:[#allocation2 + $0x68] sm:$0xff]
    %v152 = vld [vmem:[#allocation2 + $0x70] sm:$0xff]
    %v153 = vld [vmem:[#allocation2 + $0x78] sm:$0xff]
    %v154 = vld [vmem:[%s4] sm:$0x1]
    %v156 = vlaneseq
    %v157 = vshrl.u32 %v156, 7
    %v158 = vsub.s32 0, %v157
    %v159 = vrot.slane %v154, %v158
    %161 = vmatprep.subr.mxu0 0.0
    %162 = vmatpush1.msra.mxu0 %v153
    %163 = vmatprep.subr.mxu0 0.0
    %164 = vmatpush1.msra.mxu0 %v152
    %165 = vmatprep.subr.mxu0 0.0
    %166 = vmatpush1.msra.mxu0 %v151
    %167 = vmatprep.subr.mxu0 0.0
    %168 = vmatpush1.msra.mxu0 %v150
    %169 = vmatprep.subr.mxu0 0.0
    %170 = vmatpush1.msra.mxu0 %v149
    %171 = vmatprep.subr.mxu0 0.0
    %172 = vmatpush1.msra.mxu0 %v148
    %173 = vmatprep.subr.mxu0 0.0
    %174 = vmatpush1.msra.mxu0 %v147
    %175 = vmatprep.subr.mxu0 0.0
    %176 = vmatpush1.msra.mxu0 %v146
    %177 = vmatprep.subr.mxu0 0.0
    %178 = vmatpush1.msra.mxu0 %v145
    %179 = vmatprep.subr.mxu0 0.0
    %180 = vmatpush1.msra.mxu0 %v144
    %181 = vmatprep.subr.mxu0 0.0
    %182 = vmatpush1.msra.mxu0 %v143
    %183 = vmatprep.subr.mxu0 0.0
    %184 = vmatpush1.msra.mxu0 %v142
    %185 = vmatprep.subr.mxu0 0.0
    %186 = vmatpush1.msra.mxu0 %v141
    %187 = vmatprep.subr.mxu0 0.0
    %188 = vmatpush1.msra.mxu0 %v140
    %189 = vmatprep.subr.mxu0 0.0
    %190 = vmatpush1.msra.mxu0 %v139
    %191 = vmatprep.subr.mxu0 0.0
    %192 = vmatpush1.msra.mxu0 %v138
    %193 = vmatprep.subr.mxu0 0.0
    %194 = vmatpush2.msra.mxu0 0.0
    %195 = vmatprep.subr.mxu0 0.0
    %196 = vmatpush2.msra.mxu0 0.0
    %197 = vmatprep.subr.mxu0 0.0
    %198 = vmatpush2.msra.mxu0 0.0
    %199 = vmatprep.subr.mxu0 0.0
    %200 = vmatpush2.msra.mxu0 0.0
    %201 = vmatprep.subr.mxu0 0.0
    %202 = vmatpush2.msra.mxu0 0.0
    %203 = vmatprep.subr.mxu0 0.0
    %204 = vmatpush2.msra.mxu0 0.0
    %205 = vmatprep.subr.mxu0 0.0
    %206 = vmatpush2.msra.mxu0 0.0
    %207 = vmatprep.subr.mxu0 0.0
    %208 = vmatpush2.msra.mxu0 0.0
    %209 = vmatprep.subr.mxu0 0.0
    %210 = vmatpush2.msra.mxu0 0.0
    %211 = vmatprep.subr.mxu0 0.0
    %212 = vmatpush2.msra.mxu0 0.0
    %213 = vmatprep.subr.mxu0 0.0
    %214 = vmatpush2.msra.mxu0 0.0
    %215 = vmatprep.subr.mxu0 0.0
    %216 = vmatpush2.msra.mxu0 0.0
    %217 = vmatprep.subr.mxu0 0.0
    %218 = vmatpush2.msra.mxu0 0.0
    %219 = vmatprep.subr.mxu0 0.0
    %220 = vmatpush2.msra.mxu0 0.0
    %221 = vmatprep.subr.mxu0 0.0
    %222 = vmatpush2.msra.mxu0 0.0
    %223 = vmatprep.subr.mxu0 0.0
    %224 = vmatpush2.msra.mxu0 0.0
    %225 = vmatprep.mubr.f32.mxu0 0.0
    %226 = vmatmul.mubr.f32.gmra.mxu0 %v137
    %v227 = vpop.f32.mrf.mxu0
    %v228 = vadd.f32 %v159, %v227
    %v229 = vpop.f32.mrf.mxu0
    %230 = vdwg.mxu0
    %v231 = vmax.f32 %v228, 0.0
    %v232 = vld [vmem:[#allocation4] sm:$0xff]
    %v233 = vld [vmem:[#allocation4 + $0x8] sm:$0xff]
    %v234 = vld [vmem:[#allocation4 + $0x10] sm:$0xff]
    %v235 = vld [vmem:[#allocation4 + $0x18] sm:$0xff]
    %v236 = vld [vmem:[#allocation4 + $0x20] sm:$0xff]
    %v237 = vld [vmem:[#allocation4 + $0x28] sm:$0xff]
    %v238 = vld [vmem:[#allocation4 + $0x30] sm:$0xff]
    %v239 = vld [vmem:[#allocation4 + $0x38] sm:$0xff]
    %v240 = vld [vmem:[#allocation4 + $0x40] sm:$0xff]
    %v241 = vld [vmem:[#allocation4 + $0x48] sm:$0xff]
    %v242 = vld [vmem:[#allocation4 + $0x50] sm:$0xff]
    %v243 = vld [vmem:[#allocation4 + $0x58] sm:$0xff]
    %v244 = vld [vmem:[#allocation4 + $0x60] sm:$0xff]
    %v245 = vld [vmem:[#allocation4 + $0x68] sm:$0xff]
    %v246 = vld [vmem:[#allocation4 + $0x70] sm:$0xff]
    %v247 = vld [vmem:[#allocation4 + $0x78] sm:$0xff]
    %v248 = vld [vmem:[%s6] sm:$0x1]
    %v250 = vlaneseq
    %v251 = vshrl.u32 %v250, 7
    %v252 = vsub.s32 0, %v251
    %v253 = vrot.slane %v248, %v252
    %255 = vmatprep.subr.mxu0 0.0
    %256 = vmatpush1.msra.mxu0 %v247
    %257 = vmatprep.subr.mxu0 0.0
    %258 = vmatpush1.msra.mxu0 %v246
    %259 = vmatprep.subr.mxu0 0.0
    %260 = vmatpush1.msra.mxu0 %v245
    %261 = vmatprep.subr.mxu0 0.0
    %262 = vmatpush1.msra.mxu0 %v244
    %263 = vmatprep.subr.mxu0 0.0
    %264 = vmatpush1.msra.mxu0 %v243
    %265 = vmatprep.subr.mxu0 0.0
    %266 = vmatpush1.msra.mxu0 %v242
    %267 = vmatprep.subr.mxu0 0.0
    %268 = vmatpush1.msra.mxu0 %v241
    %269 = vmatprep.subr.mxu0 0.0
    %270 = vmatpush1.msra.mxu0 %v240
    %271 = vmatprep.subr.mxu0 0.0
    %272 = vmatpush1.msra.mxu0 %v239
    %273 = vmatprep.subr.mxu0 0.0
    %274 = vmatpush1.msra.mxu0 %v238
    %275 = vmatprep.subr.mxu0 0.0
    %276 = vmatpush1.msra.mxu0 %v237
    %277 = vmatprep.subr.mxu0 0.0
    %278 = vmatpush1.msra.mxu0 %v236
    %279 = vmatprep.subr.mxu0 0.0
    %280 = vmatpush1.msra.mxu0 %v235
    %281 = vmatprep.subr.mxu0 0.0
    %282 = vmatpush1.msra.mxu0 %v234
    %283 = vmatprep.subr.mxu0 0.0
    %284 = vmatpush1.msra.mxu0 %v233
    %285 = vmatprep.subr.mxu0 0.0
    %286 = vmatpush1.msra.mxu0 %v232
    %287 = vmatprep.subr.mxu0 0.0
    %288 = vmatpush2.msra.mxu0 0.0
    %289 = vmatprep.subr.mxu0 0.0
    %290 = vmatpush2.msra.mxu0 0.0
    %291 = vmatprep.subr.mxu0 0.0
    %292 = vmatpush2.msra.mxu0 0.0
    %293 = vmatprep.subr.mxu0 0.0
    %294 = vmatpush2.msra.mxu0 0.0
    %295 = vmatprep.subr.mxu0 0.0
    %296 = vmatpush2.msra.mxu0 0.0
    %297 = vmatprep.subr.mxu0 0.0
    %298 = vmatpush2.msra.mxu0 0.0
    %299 = vmatprep.subr.mxu0 0.0
    %300 = vmatpush2.msra.mxu0 0.0
    %301 = vmatprep.subr.mxu0 0.0
    %302 = vmatpush2.msra.mxu0 0.0
    %303 = vmatprep.subr.mxu0 0.0
    %304 = vmatpush2.msra.mxu0 0.0
    %305 = vmatprep.subr.mxu0 0.0
    %306 = vmatpush2.msra.mxu0 0.0
    %307 = vmatprep.subr.mxu0 0.0
    %308 = vmatpush2.msra.mxu0 0.0
    %309 = vmatprep.subr.mxu0 0.0
    %310 = vmatpush2.msra.mxu0 0.0
    %311 = vmatprep.subr.mxu0 0.0
    %312 = vmatpush2.msra.mxu0 0.0
    %313 = vmatprep.subr.mxu0 0.0
    %314 = vmatpush2.msra.mxu0 0.0
    %315 = vmatprep.subr.mxu0 0.0
    %316 = vmatpush2.msra.mxu0 0.0
    %317 = vmatprep.subr.mxu0 0.0
    %318 = vmatpush2.msra.mxu0 0.0
    %319 = vmatprep.mubr.f32.mxu0 0.0
    %320 = vmatmul.mubr.f32.gmra.mxu0 %v231
    %v321 = vpop.f32.mrf.mxu0
    %v322 = vadd.f32 %v253, %v321
    %v323 = vpop.f32.mrf.mxu0
    %324 = vdwg.mxu0
    %325 = vst [vmem:[%s7] sm:$0xff] %v322
    // Predicated region
    $region38: #{dqn_forward.1} parent=1 // pred_check
      _
    $region39: #{dqn_forward.1} parent=1 // pred_check_branch
      %327 = sbr.rel (0) target = $region41
    $region40: #{dqn_forward.1} parent=1 // pred_region
      _
    $region41: #{dqn_forward.1} parent=1 // pred_fallthru
      _
    // Predicated region
    $region42: #{dqn_forward.1} parent=1 // pred_check
      _
    $region43: #{dqn_forward.1} parent=1 // pred_check_branch
      %329 = sbr.rel (0) target = $region45
    $region44: #{dqn_forward.1} parent=1 // pred_region
      _
    $region45: #{dqn_forward.1} parent=1 // pred_fallthru
      _
    %330 = vsyncpa [#allocation3], 1
    %331 = vsyncpa [#allocation5], 1

</llo_original>
